<compile_context>
chip_gen: v7x
topology: tpu7x:2x2x1
jax: 0.10.0
libtpu: 0.0.40
codegen_flags: <defaults>
</compile_context>

<pallas_src>
import functools

import jax
import jax.numpy as jnp
import numpy as np
from jax.experimental import pallas as pl
from jax.experimental.pallas import tpu as pltpu


# ----------------------------------------------------------------------------
# Parameter setup (glue): sinusoidal positional-encoding table, deterministic.
# ----------------------------------------------------------------------------
def make_pe_table(d_model: int, max_len: int = 5000) -> jnp.ndarray:
    position = np.arange(0, max_len, dtype=np.float32)[:, None]            # (L, 1)
    div_term = np.exp(
        np.arange(0, d_model, 2, dtype=np.float32) * (-np.log(10000.0) / d_model)
    )                                                                       # (D/2,)
    pe = np.zeros((max_len, d_model), dtype=np.float32)
    pe[:, 0::2] = np.sin(position * div_term)
    pe[:, 1::2] = np.cos(position * div_term)
    return jnp.asarray(pe)


# ----------------------------------------------------------------------------
# Pallas kernels (operate on lane-dense 2-D tiles)
# ----------------------------------------------------------------------------
def _add_pe_kernel(x_ref, pe_ref, o_ref):
    # x_ref: (TB, TC), pe_ref: (1, TC) broadcast over the sublane axis.
    o_ref[...] = (x_ref[...] + pe_ref[...]).astype(o_ref.dtype)


def _add_pe_dropout_kernel(x_ref, pe_ref, m_ref, o_ref, *, scale: float):
    # Inverted dropout: mask is 0/1 (float), scale = 1/(1-p).
    y = x_ref[...] + pe_ref[...]
    o_ref[...] = (y * (m_ref[...] * jnp.asarray(scale, y.dtype))).astype(o_ref.dtype)


# ----------------------------------------------------------------------------
# Tiling helpers
# ----------------------------------------------------------------------------
def _largest_divisor_tile(n: int, unit: int, cap: int) -> int:
    """Largest multiple of `unit` that divides n and is <= cap.

    If n is not a multiple of `unit`, fall back to the full dimension
    (a full-extent block is always legal)."""
    if n % unit != 0:
        return n
    best = unit
    t = unit
    limit = min(n, max(unit, cap))
    while t <= limit:
        if n % t == 0:
            best = t
        t += unit
    return best


def _choose_tiles(B: int, N: int, itemsize: int):
    # Lane tile: multiple of 128, <= 32K elements (128 KiB at f32).
    tc = _largest_divisor_tile(N, 128, 32768)
    # Sublane tile: multiple of 8 (or full B), x tile bounded to ~1 MiB.
    cap_tb = max(8, (1 << 20) // max(1, tc * itemsize))
    tb = _largest_divisor_tile(B, 8, cap_tb)
    return tb, tc


# ----------------------------------------------------------------------------
# Wrapper
# ----------------------------------------------------------------------------
def positional_encoding(x, pe_table, *, p: float = 0.1, training: bool = False,
                        rng_key=None):
    """x: (B, S, D); pe_table: (max_len, D).  Returns dropout(x + pe[:S])."""
    B, S, D = x.shape
    N = S * D

    pe_slice = pe_table[:S].astype(x.dtype)          # (S, D)  -- static slice, glue
    x2 = x.reshape(B, N)                              # lane-dense 2-D slab
    pe2 = pe_slice.reshape(1, N)

    itemsize = jnp.dtype(x.dtype).itemsize
    TB, TC = _choose_tiles(B, N, itemsize)
    grid = (B // TB, N // TC)

    x_spec = pl.BlockSpec((TB, TC), lambda r, c: (r, c))
    pe_spec = pl.BlockSpec((1, TC), lambda r, c: (0, c))
    out_spec = pl.BlockSpec((TB, TC), lambda r, c: (r, c))
    out_shape = jax.ShapeDtypeStruct((B, N), x.dtype)

    cparams = pltpu.CompilerParams(
        dimension_semantics=("parallel", "parallel"),
        vmem_limit_bytes=32 * 1024 * 1024,
    )

    if not training or p <= 0.0:
        out2 = pl.pallas_call(
            _add_pe_kernel,
            out_shape=out_shape,
            grid=grid,
            in_specs=[x_spec, pe_spec],
            out_specs=out_spec,
            compiler_params=cparams,
            cost_estimate=pl.CostEstimate(
                flops=B * N, transcendentals=0,
                bytes_accessed=(2 * B * N + N) * itemsize),
        )(x2, pe2)
        return out2.reshape(B, S, D)

    # Training path: inverted dropout with a mask streamed from the wrapper.
    if rng_key is None:
        rng_key = jax.random.PRNGKey(0)
    keep = jax.random.bernoulli(rng_key, 1.0 - p, (B, S, D)).astype(x.dtype)
    keep2 = keep.reshape(B, N)
    scale = 1.0 / (1.0 - p)

    kernel = functools.partial(_add_pe_dropout_kernel, scale=scale)
    out2 = pl.pallas_call(
        kernel,
        out_shape=out_shape,
        grid=grid,
        in_specs=[x_spec, pe_spec, x_spec],   # mask shares x's tiling
        out_specs=out_spec,
        compiler_params=cparams,
        cost_estimate=pl.CostEstimate(
            flops=3 * B * N, transcendentals=0,
            bytes_accessed=(3 * B * N + N) * itemsize),
    )(x2, pe2, keep2)
    return out2.reshape(B, S, D)


# ----------------------------------------------------------------------------
# Demo / self-test
# ----------------------------------------------------------------------------
if __name__ == "__main__":
    key = jax.random.PRNGKey(0)

    B, S, D = 2, 8, 32          # batch, seq_len, d_model
    max_len = 64                # module default is 5000; small here

    x = jax.random.normal(key, (B, S, D), dtype=jnp.float32)
    pe = make_pe_table(D, max_len)
    expected = np.asarray(x) + np.asarray(pe)[None, :S]

    # Eval-mode forward (dropout = identity): must match reference exactly.
    y = positional_encoding(x, pe, p=0.1, training=False)
    y = jax.block_until_ready(y)
    np.testing.assert_allclose(np.asarray(y), expected, rtol=1e-6, atol=1e-6)

    # Training-mode forward (inverted dropout). The keep mask is a
    # deterministic function of the key, so the reference is exact.
    drop_key = jax.random.PRNGKey(123)
    y_tr = positional_encoding(x, pe, p=0.1, training=True, rng_key=drop_key)
    y_tr = jax.block_until_ready(y_tr)

    keep_ref = np.asarray(
        jax.random.bernoulli(drop_key, 0.9, (B, S, D)).astype(jnp.float32))
    expected_tr = expected * keep_ref / 0.9
    np.testing.assert_allclose(np.asarray(y_tr), expected_tr, rtol=1e-5, atol=1e-5)

    print("KERNEL_OK")
</pallas_src>

<mosaic_0001>
module attributes {stable_mosaic.version = 11 : i64} {
  func.func @_add_pe_kernel(%arg0: i32, %arg1: i32, %arg2: memref<2x256xf32, #tpu.memory_space<vmem>>, %arg3: memref<1x256xf32, #tpu.memory_space<vmem>>, %arg4: memref<2x256xf32, #tpu.memory_space<vmem>>) attributes {dimension_semantics = [#tpu.dimension_semantics<parallel>, #tpu.dimension_semantics<parallel>], iteration_bounds = array<i64: 1, 1>, scalar_prefetch = 0 : i64, scratch_operands = 0 : i64, tpu.core_type = #tpu.core_type<tc>, window_params = [{transform_indices = @transform_0, window_bounds = array<i64: 2, 256>}, {transform_indices = @transform_1, window_bounds = array<i64: 1, 256>}, {transform_indices = @transform_2, window_bounds = array<i64: 2, 256>}]} {
    %c0 = arith.constant 0 : index
    %c0_0 = arith.constant 0 : index
    %0 = vector.load %arg2[%c0, %c0_0] : memref<2x256xf32, #tpu.memory_space<vmem>>, vector<2x256xf32>
    %c0_1 = arith.constant 0 : index
    %c0_2 = arith.constant 0 : index
    %1 = vector.load %arg3[%c0_1, %c0_2] : memref<1x256xf32, #tpu.memory_space<vmem>>, vector<1x256xf32>
    %2 = vector.broadcast %1 : vector<1x256xf32> to vector<2x256xf32>
    %3 = arith.addf %0, %2 : vector<2x256xf32>
    %c0_3 = arith.constant 0 : index
    %c0_4 = arith.constant 0 : index
    %4 = vector.load %arg4[%c0_3, %c0_4] : memref<2x256xf32, #tpu.memory_space<vmem>>, vector<2x256xf32>
    tpu.vector_store %arg4[%c0_3, %c0_4], %3 {strides = array<i32>} : memref<2x256xf32, #tpu.memory_space<vmem>>, vector<2x256xf32>,
    return
  }
  func.func @transform_0(%arg0: i32, %arg1: i32) -> (i32, i32) {
    %c0_i32 = arith.constant 0 : i32
    return %arg0, %arg1 : i32, i32
  }
  func.func @transform_1(%arg0: i32, %arg1: i32) -> (i32, i32) {
    %c0_i32 = arith.constant 0 : i32
    %c0_i32_0 = arith.constant 0 : i32
    return %c0_i32, %arg1 : i32, i32
  }
  func.func @transform_2(%arg0: i32, %arg1: i32) -> (i32, i32) {
    %c0_i32 = arith.constant 0 : i32
    return %arg0, %arg1 : i32, i32
  }
}

</mosaic_0001>

<llo_original>
// kernel: tpu_custom_call.1
$region0: #{tpu_custom_call.1}
  #allocation0 [shape = 'u32[]', space=smem, size = 0x4, offset = 0x4, fixed_abs, tag = 'smem constant byte address 0x4 - core index']
  #allocation1 [shape = 'u32[144,128]{1,0:T(1,128)}', space=vmem, size = 0x12000, scoped, tag = 'internal scratch']
  %s0 = inlined_call_operand.hbm [shape: f32[2,256], index: 0, kind: input, shape index: {}]
  %s1 = inlined_call_operand.vmem [shape: f32[1,256], index: 1, kind: input, shape index: {}]
  %s2 = inlined_call_operand.hbm [shape: f32[2,256], index: 2, kind: output, shape index: {}]
  %s3 = sld [smem:[#allocation0]]
  $region22: #{tpu_custom_call.1} parent=0
    _
  %s5 = ssub.s32 1, %s3
  %s6 = scalar_select 0, %s5, %s3
  $region1: #{tpu_custom_call.1} parent=0
    #allocation2 [shape = 'u8[2048]{0}', space=vmem, size = 0x800, scoped, tag = 'input window, operand 0, single buffered']
    #allocation3 [shape = 's32[1]{0}', space=sflag, size = 0x4, scoped, tag = 'scoped memory for tpu_custom_call.1']
    #allocation4 [shape = 's32[1]{0}', space=sflag, size = 0x4, scoped, tag = 'scoped memory for tpu_custom_call.1']
    #allocation5 [shape = 'u8[2048]{0}', space=vmem, size = 0x800, scoped, tag = 'output window, operand 0, single buffered']
    %7 = vsyncpa [#allocation3], 0
    %8 = vsyncpa [#allocation4], 0
    // Predicated region
    $region2: #{tpu_custom_call.1} parent=1 // pred_check
      _
    $region3: #{tpu_custom_call.1} parent=1 // pred_check_branch
      %10 = sbr.rel (0) target = $region5
    $region4: #{tpu_custom_call.1} parent=1 // pred_region
      %s12 = ssub.s32 64, 64
      %13 = vsyncadd [#allocation3], %s12
      %s15 = sshll.u32 [#allocation2], 4
      %s16 = int_to_ptr.vmem [resolvable:$true] %s15
      %18 = dma.hbm_to_vmem [thread:$0]  %s0, 64, %s16, [#allocation3]
    $region5: #{tpu_custom_call.1} parent=1 // pred_fallthru
      _
    // Predicated region
    $region6: #{tpu_custom_call.1} parent=1 // pred_check
      _
    $region7: #{tpu_custom_call.1} parent=1 // pred_check_branch
      %20 = sbr.rel (0) target = $region9
    $region8: #{tpu_custom_call.1} parent=1 // pred_region
      _
    $region9: #{tpu_custom_call.1} parent=1 // pred_fallthru
      _
    // Predicated region
    $region10: #{tpu_custom_call.1} parent=1 // pred_check
      _
    $region11: #{tpu_custom_call.1} parent=1 // pred_check_branch
      %22 = sbr.rel (0) target = $region13
    $region12: #{tpu_custom_call.1} parent=1 // pred_region
      %23 = dma.done [#allocation3], 64
    $region13: #{tpu_custom_call.1} parent=1 // pred_fallthru
      _
    %v24 = vld [vmem:[#allocation2] sm:$0xf]
    %v25 = vld [vmem:[%s1] sm:$0x3]
    %v27 = vlaneseq
    %v28 = vshrl.u32 %v27, 7
    %v29 = vsub.s32 0, %v28
    %v30 = vrot.slane %v25, %v29
    %v31 = vlaneseq
    %v32 = vshrl.u32 %v31, 7
    %v33 = vsub.s32 1, %v32
    %v34 = vrot.slane %v25, %v33
    %v35 = vcombine.low %v30, %v34
    %v37 = vunpack.c.l.s4 1983009808
    %v38 = vunpack.c.0.s8 %v37
    %v39 = vlaneseq
    %v40 = vshrl.u32 %v39, 7
    %v41 = vsub.s32 %v38, %v40
    %v42 = vrot.slane %v35, %v41
    %v44 = vadd.f32 %v24, %v42
    %45 = vst [vmem:[#allocation5] sm:$0xf] %v44
    // Predicated region
    $region14: #{tpu_custom_call.1} parent=1 // pred_check
      _
    $region15: #{tpu_custom_call.1} parent=1 // pred_check_branch
      %47 = sbr.rel (0) target = $region17
    $region16: #{tpu_custom_call.1} parent=1 // pred_region
      %s49 = ssub.s32 64, 64
      %50 = vsyncadd [#allocation4], %s49
      %s52 = sshll.u32 [#allocation5], 4
      %s53 = int_to_ptr.vmem [resolvable:$true] %s52
      %55 = dma.vmem_to_hbm [thread:$0]  %s53, 64, %s2, [#allocation4]
    $region17: #{tpu_custom_call.1} parent=1 // pred_fallthru
      _
    // Predicated region
    $region18: #{tpu_custom_call.1} parent=1 // pred_check
      _
    $region19: #{tpu_custom_call.1} parent=1 // pred_check_branch
      %57 = sbr.rel (0) target = $region21
    $region20: #{tpu_custom_call.1} parent=1 // pred_region
      %58 = dma.done [#allocation4], 64
    $region21: #{tpu_custom_call.1} parent=1 // pred_fallthru
      _
    %59 = vsyncpa [#allocation3], 1
    %60 = vsyncpa [#allocation4], 1

</llo_original>
